<compile_context>
chip_gen: v7x
topology: tpu7x:2x2x1
jax: 0.10.0
libtpu: 0.0.40
codegen_flags: <defaults>
</compile_context>

<pallas_src>
import functools

import jax
import jax.numpy as jnp
from jax.experimental import pallas as pl
from jax.experimental.pallas import tpu as pltpu


def _temporal_block_kernel(*refs, K, dilation, t_tile, b_tile, has_downsample):
    """Fused TemporalBlock forward on one (batch-tile, time-tile) block.

    Ref layout (channels on sublanes, time on lanes):
      x_ref     : (B_tile, Cin,  T_tile)   current input block
      w1_ref    : (Cout, K*Cin)            conv1 weights, taps flattened
      b1_ref    : (Cout, 1)
      w2_ref    : (Cout, K*Cout)           conv2 weights, taps flattened
      b2_ref    : (Cout, 1)
      wd_ref    : (Cout, Cin)              1x1 downsample weights (optional)
      bd_ref    : (Cout, 1)                (optional)
      out_ref   : (B_tile, Cout, T_tile)
      xhist_ref : (B_tile, Cin,  pad)      VMEM scratch: causal history of x
      hhist_ref : (B_tile, Cout, pad)      VMEM scratch: causal history of h1
    """
    if has_downsample:
        (x_ref, w1_ref, b1_ref, w2_ref, b2_ref, wd_ref, bd_ref,
         out_ref, xhist_ref, hhist_ref) = refs
    else:
        (x_ref, w1_ref, b1_ref, w2_ref, b2_ref,
         out_ref, xhist_ref, hhist_ref) = refs
        wd_ref = bd_ref = None

    pad = (K - 1) * dilation
    t_idx = pl.program_id(1)
    cdtype = x_ref.dtype

    # Causal start of every sequence: zero ONLY the pad-wide history, and only
    # on the first time tile.  Scratch persists across the sequential time
    # grid steps (time axis is "arbitrary", batch axis is "parallel").
    if pad > 0:
        @pl.when(t_idx == 0)
        def _():
            xhist_ref[...] = jnp.zeros_like(xhist_ref)
            hhist_ref[...] = jnp.zeros_like(hhist_ref)

    # Grid-invariant weight blocks: load once per step.
    w1 = w1_ref[...]
    b1 = b1_ref[...]
    w2 = w2_ref[...]
    b2 = b2_ref[...]

    def causal_conv(cur, hist_ref, bb, w, b):
        # cur: (C, T_tile) activations in the model dtype.  Tap windows are
        # composed in registers from `cur` plus the pad-wide causal history
        # (lane-axis concatenate) -- no full-tile staging round trip.
        if pad > 0:
            hist = hist_ref[bb]                              # (C, pad)
            windows = []
            for k in range(K - 1):
                s = pad - k * dilation                       # left shift of tap k
                h_part = hist[:, k * dilation:]              # (C, s)
                if s >= t_tile:                              # window fully in history
                    windows.append(h_part)
                else:
                    windows.append(jnp.concatenate(
                        [h_part, cur[:, :t_tile - s]], axis=1))
            windows.append(cur)                              # last tap: no shift
            stacked = jnp.concatenate(windows, axis=0)       # (K*C, T_tile)
            # Carry the last `pad` columns as the next tile's causal history.
            hist_ref[bb] = cur[:, t_tile - pad:]
        else:
            stacked = cur
        # One fused MXU push over the K*C contraction (vs. K tiny dots).
        return jnp.dot(w, stacked, preferred_element_type=jnp.float32) + b

    for bb in range(b_tile):
        x_b = x_ref[bb]                                      # (Cin, T_tile)
        # conv1 -> relu   (dropout1 = identity in eval mode)
        h1 = jnp.maximum(causal_conv(x_b, xhist_ref, bb, w1, b1), 0.0)
        # conv2 -> relu   (dropout2 = identity in eval mode)
        h2 = jnp.maximum(
            causal_conv(h1.astype(cdtype), hhist_ref, bb, w2, b2), 0.0)
        # Residual: re-read x right before use (shortens its live range).
        x_res = x_ref[bb]
        if has_downsample:
            res = jnp.dot(wd_ref[...], x_res,
                          preferred_element_type=jnp.float32) + bd_ref[...]
        else:
            res = x_res.astype(jnp.float32)
        out_ref[bb] = jnp.maximum(h2 + res, 0.0).astype(out_ref.dtype)


def _select_tiles(B, Cin, Cout, T, K, dilation, x_itemsize, w_itemsize,
                  t_tile=None, b_tile=None):
    """Pick (B_tile, T_tile) from a VMEM budget.

    Budget ~ double-buffered x/out blocks + double-buffered weights + history
    scratch + in-kernel f32 intermediates; kept well under the default scoped
    VMEM limit on all generations (v5e 16 MiB, v6e/v7x 32 MiB).
    """
    pad = (K - 1) * dilation

    # Batch tile: amortize per-grid-step overhead while always leaving >= 2
    # grid steps on the "parallel" batch axis (feeds both v7x TensorCores).
    if b_tile is None:
        b_tile = 1
        for cand in (8, 4, 2):
            if B % cand == 0 and B // cand >= 2:
                b_tile = cand
                break
    assert B % b_tile == 0, "B must be divisible by the batch tile"

    w_bytes = 2 * (K * Cout * Cin + K * Cout * Cout
                   + Cout * Cin + 3 * Cout) * w_itemsize     # double-buffered

    def vmem_bytes(t):
        io = 2 * b_tile * (Cin + Cout) * t * x_itemsize      # x + out, 2-buffered
        hist = b_tile * (Cin + Cout) * max(pad, 1) * x_itemsize
        live = (K * Cin + K * Cout + 3 * Cout + Cin) * t * 4  # f32 intermediates
        return io + hist + w_bytes + live

    budget = 12 * 1024 * 1024

    if t_tile is None:
        if vmem_bytes(T) <= budget:
            t_tile = T                                       # one tile per sequence
        else:
            t_tile = None
            for cand in (8192, 4096, 2048, 1024, 512, 256, 128):
                if T % cand == 0 and cand >= pad and vmem_bytes(cand) <= budget:
                    t_tile = cand
                    break
            if t_tile is None:
                # Last resort: smallest lane-dense divisor covering the
                # receptive field.
                t_tile = T
                for cand in (128, 256, 512, 1024, 2048, 4096, 8192):
                    if T % cand == 0 and cand >= pad:
                        t_tile = cand
                        break

    assert T % t_tile == 0, "T must be divisible by the time tile"
    assert pad <= t_tile, "time tile must cover the causal receptive field"
    return b_tile, t_tile


def temporal_block(x, params, *, kernel_size, dilation, t_tile=None, b_tile=None):
    """TemporalBlock forward.  x: (B, Cin, T) -> (B, Cout, T)  (NCL layout).

    params = (w1, b1, w2, b2, wd, bd) in PyTorch nn.Conv1d layout:
      w1 : (Cout, Cin,  K),  b1 : (Cout,)
      w2 : (Cout, Cout, K),  b2 : (Cout,)
      wd : (Cout, Cin, 1) or None (None iff n_inputs == n_outputs)
      bd : (Cout,)        or None
    """
    w1, b1, w2, b2, wd, bd = params
    B, Cin, T = x.shape
    K = kernel_size
    Cout = w1.shape[0]
    assert w1.shape == (Cout, Cin, K)
    pad = (K - 1) * dilation
    has_downsample = wd is not None
    if not has_downsample:
        assert Cin == Cout, "identity residual requires n_inputs == n_outputs"

    b_tile, t_tile = _select_tiles(
        B, Cin, Cout, T, K, dilation,
        jnp.dtype(x.dtype).itemsize, jnp.dtype(w1.dtype).itemsize,
        t_tile=t_tile, b_tile=b_tile)

    # Host-side weight massaging: flatten the K taps into the contraction dim
    # so the kernel does ONE matmul per conv.  Row order matches the kernel's
    # stacked window order (k*C + c).
    w1f = jnp.transpose(w1, (0, 2, 1)).reshape(Cout, K * Cin)
    w2f = jnp.transpose(w2, (0, 2, 1)).reshape(Cout, K * Cout)
    b1c = b1.reshape(Cout, 1)
    b2c = b2.reshape(Cout, 1)

    kernel = functools.partial(
        _temporal_block_kernel, K=K, dilation=dilation, t_tile=t_tile,
        b_tile=b_tile, has_downsample=has_downsample)

    in_specs = [
        pl.BlockSpec((b_tile, Cin, t_tile), lambda b, t: (b, 0, t)),
        pl.BlockSpec((Cout, K * Cin), lambda b, t: (0, 0)),
        pl.BlockSpec((Cout, 1), lambda b, t: (0, 0)),
        pl.BlockSpec((Cout, K * Cout), lambda b, t: (0, 0)),
        pl.BlockSpec((Cout, 1), lambda b, t: (0, 0)),
    ]
    args = [x, w1f, b1c, w2f, b2c]
    if has_downsample:
        in_specs += [pl.BlockSpec((Cout, Cin), lambda b, t: (0, 0)),
                     pl.BlockSpec((Cout, 1), lambda b, t: (0, 0))]
        args += [wd.reshape(Cout, Cin), bd.reshape(Cout, 1)]

    hist_w = max(pad, 1)
    return pl.pallas_call(
        kernel,
        out_shape=jax.ShapeDtypeStruct((B, Cout, T), x.dtype),
        grid_spec=pltpu.PrefetchScalarGridSpec(
            num_scalar_prefetch=0,
            grid=(B // b_tile, T // t_tile),
            in_specs=in_specs,
            out_specs=pl.BlockSpec((b_tile, Cout, t_tile),
                                   lambda b, t: (b, 0, t)),
            scratch_shapes=[
                pltpu.VMEM((b_tile, Cin, hist_w), x.dtype),
                pltpu.VMEM((b_tile, Cout, hist_w), x.dtype),
            ],
        ),
        compiler_params=pltpu.CompilerParams(
            dimension_semantics=("parallel", "arbitrary")),
    )(*args)


def reference_forward(x, params, *, kernel_size, dilation):
    """Pure-JAX reference with identical math (NCL layout, PyTorch weights)."""
    w1, b1, w2, b2, wd, bd = params
    B, Cin, T = x.shape
    K = kernel_size
    pad = (K - 1) * dilation

    def causal_conv(inp, w, b):
        xp = jnp.pad(inp.astype(jnp.float32), ((0, 0), (0, 0), (pad, 0)))
        acc = jnp.zeros((B, w.shape[0], T), jnp.float32)
        for k in range(K):
            acc = acc + jnp.einsum('oc,bct->bot', w[:, :, k],
                                   xp[:, :, k * dilation:k * dilation + T])
        return acc + b[None, :, None]

    h1 = jax.nn.relu(causal_conv(x, w1, b1))
    h2 = jax.nn.relu(causal_conv(h1, w2, b2))
    if wd is None:
        res = x.astype(jnp.float32)
    else:
        res = (jnp.einsum('oc,bct->bot', wd.reshape(wd.shape[0], -1), x)
               + bd[None, :, None])
    return jax.nn.relu(h2 + res).astype(x.dtype)


if __name__ == "__main__":
    def make_params(key, Cin, Cout, K):
        k1, kb1, k2, kb2, kd, kbd = jax.random.split(key, 6)
        s1 = 1.0 / (Cin * K) ** 0.5
        s2 = 1.0 / (Cout * K) ** 0.5
        sd = 1.0 / Cin ** 0.5
        w1 = s1 * jax.random.normal(k1, (Cout, Cin, K), jnp.float32)
        b1 = s1 * jax.random.normal(kb1, (Cout,), jnp.float32)
        w2 = s2 * jax.random.normal(k2, (Cout, Cout, K), jnp.float32)
        b2 = s2 * jax.random.normal(kb2, (Cout,), jnp.float32)
        if Cin != Cout:  # downsample exists only when n_inputs != n_outputs
            wd = sd * jax.random.normal(kd, (Cout, Cin, 1), jnp.float32)
            bd = sd * jax.random.normal(kbd, (Cout,), jnp.float32)
        else:
            wd = bd = None
        return (w1, b1, w2, b2, wd, bd)

    configs = [
        # Module config: TemporalBlock(4, 8, kernel_size=3, stride=1, dilation=2)
        dict(B=2, Cin=4, Cout=8, T=16, K=3, dilation=2, t_tile=None),
        # Same block, longer sequence, forced two time tiles (history carry).
        dict(B=2, Cin=4, Cout=8, T=256, K=3, dilation=2, t_tile=128),
        # n_inputs == n_outputs -> identity residual path (no 1x1 downsample).
        dict(B=2, Cin=8, Cout=8, T=16, K=3, dilation=1, t_tile=None),
        # Larger batch/seq: exercises batch blocking (B_tile=2) + auto t_tile.
        dict(B=4, Cin=8, Cout=8, T=512, K=3, dilation=4, t_tile=None),
        # kernel_size=1 -> pad=0 path (no causal history at all).
        dict(B=2, Cin=4, Cout=8, T=16, K=1, dilation=1, t_tile=None),
    ]

    key = jax.random.PRNGKey(0)
    for i, cfg in enumerate(configs):
        key, kx, kp = jax.random.split(key, 3)
        B, Cin, Cout, T = cfg["B"], cfg["Cin"], cfg["Cout"], cfg["T"]
        K, dil = cfg["K"], cfg["dilation"]

        x = jax.random.normal(kx, (B, Cin, T), jnp.float32)
        params = make_params(kp, Cin, Cout, K)

        out = temporal_block(x, params, kernel_size=K, dilation=dil,
                             t_tile=cfg["t_tile"])
        out = jax.block_until_ready(out)

        ref = reference_forward(x, params, kernel_size=K, dilation=dil)
        assert out.shape == (B, Cout, T)
        assert jnp.allclose(out, ref, rtol=1e-4, atol=1e-4), \
            f"mismatch vs reference in config {i}: {cfg}"

    print("KERNEL_OK")
</pallas_src>

<mosaic_0001>
module attributes {stable_mosaic.version = 11 : i64} {
  func.func @_temporal_block_kernel(%arg0: i32, %arg1: i32, %arg2: memref<1x4x16xf32, #tpu.memory_space<vmem>>, %arg3: memref<8x12xf32, #tpu.memory_space<vmem>>, %arg4: memref<8x1xf32, #tpu.memory_space<vmem>>, %arg5: memref<8x24xf32, #tpu.memory_space<vmem>>, %arg6: memref<8x1xf32, #tpu.memory_space<vmem>>, %arg7: memref<8x4xf32, #tpu.memory_space<vmem>>, %arg8: memref<8x1xf32, #tpu.memory_space<vmem>>, %arg9: memref<1x8x16xf32, #tpu.memory_space<vmem>>, %arg10: memref<1x4x4xf32, #tpu.memory_space<vmem>>, %arg11: memref<1x8x4xf32, #tpu.memory_space<vmem>>) attributes {dimension_semantics = [#tpu.dimension_semantics<parallel>, #tpu.dimension_semantics<arbitrary>], iteration_bounds = array<i64: 2, 1>, scalar_prefetch = 0 : i64, scratch_operands = 2 : i64, tpu.core_type = #tpu.core_type<tc>, window_params = [{transform_indices = @transform_0, window_bounds = array<i64: 1, 4, 16>}, {pipeline_mode = #tpu.pipeline_mode<synchronous>, transform_indices = @transform_1, window_bounds = array<i64: 8, 12>}, {pipeline_mode = #tpu.pipeline_mode<synchronous>, transform_indices = @transform_2, window_bounds = array<i64: 8, 1>}, {pipeline_mode = #tpu.pipeline_mode<synchronous>, transform_indices = @transform_3, window_bounds = array<i64: 8, 24>}, {pipeline_mode = #tpu.pipeline_mode<synchronous>, transform_indices = @transform_4, window_bounds = array<i64: 8, 1>}, {pipeline_mode = #tpu.pipeline_mode<synchronous>, transform_indices = @transform_5, window_bounds = array<i64: 8, 4>}, {pipeline_mode = #tpu.pipeline_mode<synchronous>, transform_indices = @transform_6, window_bounds = array<i64: 8, 1>}, {transform_indices = @transform_7, window_bounds = array<i64: 1, 8, 16>}]} {
    %c0_i32 = arith.constant 0 : i32
    %0 = arith.cmpi eq, %arg1, %c0_i32 : i32
    %1 = arith.extui %0 : i1 to i32
    %c0_i32_0 = arith.constant 0 : i32
    %2 = arith.cmpi ne, %1, %c0_i32_0 : i32
    scf.if %2 {
      %cst_38 = arith.constant 0.000000e+00 : f32
      %56 = vector.broadcast %cst_38 : f32 to vector<1x4x4xf32>
      %c0_39 = arith.constant 0 : index
      %c0_40 = arith.constant 0 : index
      %c0_41 = arith.constant 0 : index
      %57 = vector.load %arg10[%c0_39, %c0_40, %c0_41] : memref<1x4x4xf32, #tpu.memory_space<vmem>>, vector<1x4x4xf32>
      tpu.vector_store %arg10[%c0_39, %c0_40, %c0_41], %56 {strides = array<i32>} : memref<1x4x4xf32, #tpu.memory_space<vmem>>, vector<1x4x4xf32>,
      %cst_42 = arith.constant 0.000000e+00 : f32
      %58 = vector.broadcast %cst_42 : f32 to vector<1x8x4xf32>
      %c0_43 = arith.constant 0 : index
      %c0_44 = arith.constant 0 : index
      %c0_45 = arith.constant 0 : index
      %59 = vector.load %arg11[%c0_43, %c0_44, %c0_45] : memref<1x8x4xf32, #tpu.memory_space<vmem>>, vector<1x8x4xf32>
      tpu.vector_store %arg11[%c0_43, %c0_44, %c0_45], %58 {strides = array<i32>} : memref<1x8x4xf32, #tpu.memory_space<vmem>>, vector<1x8x4xf32>,
    } else {
    }
    %c0 = arith.constant 0 : index
    %c0_1 = arith.constant 0 : index
    %3 = vector.load %arg3[%c0, %c0_1] : memref<8x12xf32, #tpu.memory_space<vmem>>, vector<8x12xf32>
    %c0_2 = arith.constant 0 : index
    %c0_3 = arith.constant 0 : index
    %4 = vector.load %arg4[%c0_2, %c0_3] : memref<8x1xf32, #tpu.memory_space<vmem>>, vector<8x1xf32>
    %c0_4 = arith.constant 0 : index
    %c0_5 = arith.constant 0 : index
    %5 = vector.load %arg5[%c0_4, %c0_5] : memref<8x24xf32, #tpu.memory_space<vmem>>, vector<8x24xf32>
    %c0_6 = arith.constant 0 : index
    %c0_7 = arith.constant 0 : index
    %6 = vector.load %arg6[%c0_6, %c0_7] : memref<8x1xf32, #tpu.memory_space<vmem>>, vector<8x1xf32>
    %c0_8 = arith.constant 0 : index
    %c0_9 = arith.constant 0 : index
    %c0_10 = arith.constant 0 : index
    %7 = vector.load %arg2[%c0_8, %c0_9, %c0_10] : memref<1x4x16xf32, #tpu.memory_space<vmem>>, vector<1x4x16xf32>
    %8 = vector.shape_cast %7 : vector<1x4x16xf32> to vector<4x16xf32>
    %c0_11 = arith.constant 0 : index
    %c0_12 = arith.constant 0 : index
    %c0_13 = arith.constant 0 : index
    %9 = vector.load %arg10[%c0_11, %c0_12, %c0_13] : memref<1x4x4xf32, #tpu.memory_space<vmem>>, vector<1x4x4xf32>
    %10 = vector.shape_cast %9 : vector<1x4x4xf32> to vector<4x4xf32>
    %11 = vector.extract_strided_slice %8 {offsets = [0, 0], sizes = [4, 12], strides = [1, 1]} : vector<4x16xf32> to vector<4x12xf32>
    %12 = tpu.concatenate %10, %11 in 1 : vector<4x4xf32>, vector<4x12xf32> -> vector<4x16xf32>
    %13 = vector.extract_strided_slice %10 {offsets = [0, 2], sizes = [4, 2], strides = [1, 1]} : vector<4x4xf32> to vector<4x2xf32>
    %14 = vector.extract_strided_slice %8 {offsets = [0, 0], sizes = [4, 14], strides = [1, 1]} : vector<4x16xf32> to vector<4x14xf32>
    %15 = tpu.concatenate %13, %14 in 1 : vector<4x2xf32>, vector<4x14xf32> -> vector<4x16xf32>
    %16 = tpu.concatenate %12, %15, %8 in 0 : vector<4x16xf32>, vector<4x16xf32>, vector<4x16xf32> -> vector<12x16xf32>
    %17 = vector.extract_strided_slice %8 {offsets = [0, 12], sizes = [4, 4], strides = [1, 1]} : vector<4x16xf32> to vector<4x4xf32>
    %c0_14 = arith.constant 0 : index
    %c0_15 = arith.constant 0 : index
    %c0_16 = arith.constant 0 : index
    %18 = vector.load %arg10[%c0_14, %c0_15, %c0_16] : memref<1x4x4xf32, #tpu.memory_space<vmem>>, vector<1x4x4xf32>
    %19 = vector.shape_cast %18 : vector<1x4x4xf32> to vector<4x4xf32>
    %20 = vector.shape_cast %17 : vector<4x4xf32> to vector<1x4x4xf32>
    tpu.vector_store %arg10[%c0_14, %c0_15, %c0_16], %20 {strides = array<i32>} : memref<1x4x4xf32, #tpu.memory_space<vmem>>, vector<1x4x4xf32>,
    %cst = arith.constant dense<0.000000e+00> : vector<8x16xf32>
    %21 = tpu.matmul %3, %16, %cst {dimension_numbers = #tpu.dot_dimension_numbers<[1], [0], [0], [1], [0, 0, 1, 1], [], []>} : vector<8x12xf32>, vector<12x16xf32>, vector<8x16xf32> -> vector<8x16xf32>
    %22 = vector.broadcast %4 : vector<8x1xf32> to vector<8x16xf32>
    %23 = arith.addf %21, %22 : vector<8x16xf32>
    %cst_17 = arith.constant 0.000000e+00 : f32
    %24 = vector.broadcast %cst_17 : f32 to vector<8x16xf32>
    %25 = arith.maximumf %23, %24 : vector<8x16xf32>
    %c0_18 = arith.constant 0 : index
    %c0_19 = arith.constant 0 : index
    %c0_20 = arith.constant 0 : index
    %26 = vector.load %arg11[%c0_18, %c0_19, %c0_20] : memref<1x8x4xf32, #tpu.memory_space<vmem>>, vector<1x8x4xf32>
    %27 = vector.shape_cast %26 : vector<1x8x4xf32> to vector<8x4xf32>
    %28 = vector.extract_strided_slice %25 {offsets = [0, 0], sizes = [8, 12], strides = [1, 1]} : vector<8x16xf32> to vector<8x12xf32>
    %29 = tpu.concatenate %27, %28 in 1 : vector<8x4xf32>, vector<8x12xf32> -> vector<8x16xf32>
    %30 = vector.extract_strided_slice %27 {offsets = [0, 2], sizes = [8, 2], strides = [1, 1]} : vector<8x4xf32> to vector<8x2xf32>
    %31 = vector.extract_strided_slice %25 {offsets = [0, 0], sizes = [8, 14], strides = [1, 1]} : vector<8x16xf32> to vector<8x14xf32>
    %32 = tpu.concatenate %30, %31 in 1 : vector<8x2xf32>, vector<8x14xf32> -> vector<8x16xf32>
    %33 = tpu.concatenate %29, %32, %25 in 0 : vector<8x16xf32>, vector<8x16xf32>, vector<8x16xf32> -> vector<24x16xf32>
    %34 = vector.extract_strided_slice %25 {offsets = [0, 12], sizes = [8, 4], strides = [1, 1]} : vector<8x16xf32> to vector<8x4xf32>
    %c0_21 = arith.constant 0 : index
    %c0_22 = arith.constant 0 : index
    %c0_23 = arith.constant 0 : index
    %35 = vector.load %arg11[%c0_21, %c0_22, %c0_23] : memref<1x8x4xf32, #tpu.memory_space<vmem>>, vector<1x8x4xf32>
    %36 = vector.shape_cast %35 : vector<1x8x4xf32> to vector<8x4xf32>
    %37 = vector.shape_cast %34 : vector<8x4xf32> to vector<1x8x4xf32>
    tpu.vector_store %arg11[%c0_21, %c0_22, %c0_23], %37 {strides = array<i32>} : memref<1x8x4xf32, #tpu.memory_space<vmem>>, vector<1x8x4xf32>,
    %cst_24 = arith.constant dense<0.000000e+00> : vector<8x16xf32>
    %38 = tpu.matmul %5, %33, %cst_24 {dimension_numbers = #tpu.dot_dimension_numbers<[1], [0], [0], [1], [0, 0, 1, 1], [], []>} : vector<8x24xf32>, vector<24x16xf32>, vector<8x16xf32> -> vector<8x16xf32>
    %39 = vector.broadcast %6 : vector<8x1xf32> to vector<8x16xf32>
    %40 = arith.addf %38, %39 : vector<8x16xf32>
    %cst_25 = arith.constant 0.000000e+00 : f32
    %41 = vector.broadcast %cst_25 : f32 to vector<8x16xf32>
    %42 = arith.maximumf %40, %41 : vector<8x16xf32>
    %c0_26 = arith.constant 0 : index
    %c0_27 = arith.constant 0 : index
    %c0_28 = arith.constant 0 : index
    %43 = vector.load %arg2[%c0_26, %c0_27, %c0_28] : memref<1x4x16xf32, #tpu.memory_space<vmem>>, vector<1x4x16xf32>
    %44 = vector.shape_cast %43 : vector<1x4x16xf32> to vector<4x16xf32>
    %c0_29 = arith.constant 0 : index
    %c0_30 = arith.constant 0 : index
    %45 = vector.load %arg7[%c0_29, %c0_30] : memref<8x4xf32, #tpu.memory_space<vmem>>, vector<8x4xf32>
    %cst_31 = arith.constant dense<0.000000e+00> : vector<8x16xf32>
    %46 = tpu.matmul %45, %44, %cst_31 {dimension_numbers = #tpu.dot_dimension_numbers<[1], [0], [0], [1], [0, 0, 1, 1], [], []>} : vector<8x4xf32>, vector<4x16xf32>, vector<8x16xf32> -> vector<8x16xf32>
    %c0_32 = arith.constant 0 : index
    %c0_33 = arith.constant 0 : index
    %47 = vector.load %arg8[%c0_32, %c0_33] : memref<8x1xf32, #tpu.memory_space<vmem>>, vector<8x1xf32>
    %48 = vector.broadcast %47 : vector<8x1xf32> to vector<8x16xf32>
    %49 = arith.addf %46, %48 : vector<8x16xf32>
    %50 = arith.addf %42, %49 : vector<8x16xf32>
    %cst_34 = arith.constant 0.000000e+00 : f32
    %51 = vector.broadcast %cst_34 : f32 to vector<8x16xf32>
    %52 = arith.maximumf %50, %51 : vector<8x16xf32>
    %c0_35 = arith.constant 0 : index
    %c0_36 = arith.constant 0 : index
    %c0_37 = arith.constant 0 : index
    %53 = vector.load %arg9[%c0_35, %c0_36, %c0_37] : memref<1x8x16xf32, #tpu.memory_space<vmem>>, vector<1x8x16xf32>
    %54 = vector.shape_cast %53 : vector<1x8x16xf32> to vector<8x16xf32>
    %55 = vector.shape_cast %52 : vector<8x16xf32> to vector<1x8x16xf32>
    tpu.vector_store %arg9[%c0_35, %c0_36, %c0_37], %55 {strides = array<i32>} : memref<1x8x16xf32, #tpu.memory_space<vmem>>, vector<1x8x16xf32>,
    return
  }
  func.func @transform_0(%arg0: i32, %arg1: i32) -> (i32, i32, i32) {
    %c0_i32 = arith.constant 0 : i32
    %c0_i32_0 = arith.constant 0 : i32
    return %arg0, %c0_i32, %arg1 : i32, i32, i32
  }
  func.func @transform_1(%arg0: i32, %arg1: i32) -> (i32, i32) {
    %c0_i32 = arith.constant 0 : i32
    %c0_i32_0 = arith.constant 0 : i32
    %c0_i32_1 = arith.constant 0 : i32
    return %c0_i32, %c0_i32_0 : i32, i32
  }
  func.func @transform_2(%arg0: i32, %arg1: i32) -> (i32, i32) {
    %c0_i32 = arith.constant 0 : i32
    %c0_i32_0 = arith.constant 0 : i32
    %c0_i32_1 = arith.constant 0 : i32
    return %c0_i32, %c0_i32_0 : i32, i32
  }
  func.func @transform_3(%arg0: i32, %arg1: i32) -> (i32, i32) {
    %c0_i32 = arith.constant 0 : i32
    %c0_i32_0 = arith.constant 0 : i32
    %c0_i32_1 = arith.constant 0 : i32
    return %c0_i32, %c0_i32_0 : i32, i32
  }
  func.func @transform_4(%arg0: i32, %arg1: i32) -> (i32, i32) {
    %c0_i32 = arith.constant 0 : i32
    %c0_i32_0 = arith.constant 0 : i32
    %c0_i32_1 = arith.constant 0 : i32
    return %c0_i32, %c0_i32_0 : i32, i32
  }
  func.func @transform_5(%arg0: i32, %arg1: i32) -> (i32, i32) {
    %c0_i32 = arith.constant 0 : i32
    %c0_i32_0 = arith.constant 0 : i32
    %c0_i32_1 = arith.constant 0 : i32
    return %c0_i32, %c0_i32_0 : i32, i32
  }
  func.func @transform_6(%arg0: i32, %arg1: i32) -> (i32, i32) {
    %c0_i32 = arith.constant 0 : i32
    %c0_i32_0 = arith.constant 0 : i32
    %c0_i32_1 = arith.constant 0 : i32
    return %c0_i32, %c0_i32_0 : i32, i32
  }
  func.func @transform_7(%arg0: i32, %arg1: i32) -> (i32, i32, i32) {
    %c0_i32 = arith.constant 0 : i32
    %c0_i32_0 = arith.constant 0 : i32
    return %arg0, %c0_i32, %arg1 : i32, i32, i32
  }
}

</mosaic_0001>

<llo_original>
// kernel: tpu_custom_call.1
$region0: #{tpu_custom_call.1}
  #allocation0 [shape = 'u32[]', space=smem, size = 0x4, offset = 0x4, fixed_abs, tag = 'smem constant byte address 0x4 - core index']
  #allocation1 [shape = 'u32[144,128]{1,0:T(1,128)}', space=vmem, size = 0x12000, scoped, tag = 'internal scratch']
  #allocation2 [shape = 'f32[1,4,4]{2,1,0:T(4,128)}', space=vmem, size = 0x800, scoped, tag = 'scratch operand']
  #allocation3 [shape = 'f32[1,8,4]{2,1,0:T(8,128)}', space=vmem, size = 0x1000, scoped, tag = 'scratch operand']
  %s0 = inlined_call_operand.vmem [shape: f32[2,4,16], index: 0, kind: input, shape index: {}]
  %s1 = inlined_call_operand.vmem [shape: f32[8,12], index: 1, kind: input, shape index: {}]
  %s2 = inlined_call_operand.vmem [shape: f32[8,1], index: 2, kind: input, shape index: {}]
  %s3 = inlined_call_operand.vmem [shape: f32[8,24], index: 3, kind: input, shape index: {}]
  %s4 = inlined_call_operand.vmem [shape: f32[8,1], index: 4, kind: input, shape index: {}]
  %s5 = inlined_call_operand.vmem [shape: f32[8,4], index: 5, kind: input, shape index: {}]
  %s6 = inlined_call_operand.vmem [shape: f32[8,1], index: 6, kind: input, shape index: {}]
  %s7 = inlined_call_operand.hbm [shape: f32[2,8,16], index: 7, kind: output, shape index: {}]
  %s8 = sld [smem:[#allocation0]]
  $region65: #{tpu_custom_call.1} parent=0
    _
  %s10 = ssub.s32 1, %s8
  %s11 = scalar_select 0, %s10, %s8
  $region1: #{tpu_custom_call.1} parent=0
    #allocation4 [shape = 'u8[8192]{0}', space=vmem, size = 0x2000, scoped, tag = 'output window, operand 0']
    #allocation5 [shape = 's32[2]{0}', space=sflag, size = 0x8, scoped, tag = 'scoped memory for tpu_custom_call.1']
    %12 = vsyncpa [#allocation5], 0
    %s13 = scalar_lea.sflag [#allocation5], 1
    %14 = vsyncpa %s13, 0
    loop: start=0, step=1, limit=4
    $region2: #{tpu_custom_call.1} parent=1 // loop_pre_header
      _
    $region3: #{tpu_custom_call.1} parent=1 // loop_header
      %s16 = sphi 0, %s20
      %p17 = scmp.ge.s32.totalorder %s16, 4
      %s23 = sphi 0, %s35
      %s24 = sphi 0, %s31
      %s25 = sphi 0, %s23
      %s26 = sphi 0, %s24
      %s27 = sphi 0, %s25
      %s28 = sphi 0, %s26
      %s40 = sphi 0, %s42
      %s43 = sphi 0, %s40
      %s44 = sphi 0, %s43
      %s60 = sphi 0, %s44
      %s64 = sphi 0, %s64
      %s66 = sphi 0, %s64
      %s67 = sphi 0, %s66
      %s81 = sphi 0, %s67
      %s85 = sphi 0, %s85
      %s87 = sphi 0, %s85
      %s88 = sphi 0, %s87
      %s102 = sphi 0, %s88
      %s106 = sphi 0, %s106
      %s108 = sphi 0, %s106
      %s109 = sphi 0, %s108
      %s123 = sphi 0, %s109
      %s127 = sphi 0, %s127
      %s129 = sphi 0, %s127
      %s130 = sphi 0, %s129
      %s144 = sphi 0, %s130
      %s148 = sphi 0, %s148
      %s150 = sphi 0, %s148
      %s151 = sphi 0, %s150
      %s165 = sphi 0, %s151
      %s169 = sphi 0, %s169
      %s171 = sphi 0, %s169
      %s172 = sphi 0, %s171
      %s186 = sphi 0, %s172
      %s194 = sphi 0, %s196
      %s197 = sphi 0, %s194
      %s198 = sphi 0, %s197
      %s214 = sphi 0, %s198
    $region4: #{tpu_custom_call.1} parent=1 // loop_header_branch
      %19 = sbr.rel (%p17) target = $region8
    $region5: #{tpu_custom_call.1} parent=1 // loop_body
      %s21 = ssub.s32 %s16, 1
      %s22 = ssub.s32 %s16, 2
      %s29 = sadd.s32 1, %s24
      %p30 = scmp.ge.s32.totalorder %s29, 1
      %s31 = scalar_select %p30, 0, %s29
      %s32 = sadd.s32 1, %s23
      %s33 = scalar_select %p30, %s32, %s23
      %p34 = scmp.ge.s32.totalorder %s33, 2
      %s35 = scalar_select %p34, 0, %s33
      %s36 = ssub.s32 %s23, %s35
      %s37 = ssub.s32 %s24, %s31
      %s38 = sor.u32 %s36, %s37
      %p39 = scmp.eq.s32.totalorder %s38, 0
      %s41 = sadd.s32 %s40, 1
      %s42 = scalar_select %p39, %s40, %s41
      %p45 = pneg %p39
      %p46 = scmp.eq.s32.totalorder %s16, 1
      %p47 = por %p45, %p46
      %p48 = scmp.ne.s32.totalorder %s40, %s43
      %p49 = scmp.eq.s32.totalorder %s16, 0
      %p50 = por %p48, %p49
      %p51 = scmp.ne.s32.totalorder %s40, %s43
      %p52 = scmp.eq.s32.totalorder %s21, 1
      %p53 = por %p51, %p52
      %p54 = scmp.ne.s32.totalorder %s43, %s44
      %p55 = scmp.eq.s32.totalorder %s21, 0
      %p56 = por %p54, %p55
      %p57 = scmp.ne.s32.totalorder %s43, %s44
      %p58 = scmp.eq.s32.totalorder %s22, 1
      %p59 = por %p57, %p58
      %p61 = scmp.ne.s32.totalorder %s44, %s60
      %p62 = scmp.eq.s32.totalorder %s22, 0
      %p63 = por %p61, %p62
      %s65 = sadd.s32 %s64, 1
      %p68 = scmp.eq.s32.totalorder %s16, 1
      %p69 = scmp.ne.s32.totalorder %s64, %s66
      %p70 = scmp.eq.s32.totalorder %s16, 0
      %p71 = por %p69, %p70
      %p72 = scmp.ne.s32.totalorder %s64, %s66
      %p73 = scmp.eq.s32.totalorder %s21, 1
      %p74 = por %p72, %p73
      %p75 = scmp.ne.s32.totalorder %s66, %s67
      %p76 = scmp.eq.s32.totalorder %s21, 0
      %p77 = por %p75, %p76
      %p78 = scmp.ne.s32.totalorder %s66, %s67
      %p79 = scmp.eq.s32.totalorder %s22, 1
      %p80 = por %p78, %p79
      %p82 = scmp.ne.s32.totalorder %s67, %s81
      %p83 = scmp.eq.s32.totalorder %s22, 0
      %p84 = por %p82, %p83
      %s86 = sadd.s32 %s85, 1
      %p89 = scmp.eq.s32.totalorder %s16, 1
      %p90 = scmp.ne.s32.totalorder %s85, %s87
      %p91 = scmp.eq.s32.totalorder %s16, 0
      %p92 = por %p90, %p91
      %p93 = scmp.ne.s32.totalorder %s85, %s87
      %p94 = scmp.eq.s32.totalorder %s21, 1
      %p95 = por %p93, %p94
      %p96 = scmp.ne.s32.totalorder %s87, %s88
      %p97 = scmp.eq.s32.totalorder %s21, 0
      %p98 = por %p96, %p97
      %p99 = scmp.ne.s32.totalorder %s87, %s88
      %p100 = scmp.eq.s32.totalorder %s22, 1
      %p101 = por %p99, %p100
      %p103 = scmp.ne.s32.totalorder %s88, %s102
      %p104 = scmp.eq.s32.totalorder %s22, 0
      %p105 = por %p103, %p104
      %s107 = sadd.s32 %s106, 1
      %p110 = scmp.eq.s32.totalorder %s16, 1
      %p111 = scmp.ne.s32.totalorder %s106, %s108
      %p112 = scmp.eq.s32.totalorder %s16, 0
      %p113 = por %p111, %p112
      %p114 = scmp.ne.s32.totalorder %s106, %s108
      %p115 = scmp.eq.s32.totalorder %s21, 1
      %p116 = por %p114, %p115
      %p117 = scmp.ne.s32.totalorder %s108, %s109
      %p118 = scmp.eq.s32.totalorder %s21, 0
      %p119 = por %p117, %p118
      %p120 = scmp.ne.s32.totalorder %s108, %s109
      %p121 = scmp.eq.s32.totalorder %s22, 1
      %p122 = por %p120, %p121
      %p124 = scmp.ne.s32.totalorder %s109, %s123
      %p125 = scmp.eq.s32.totalorder %s22, 0
      %p126 = por %p124, %p125
      %s128 = sadd.s32 %s127, 1
      %p131 = scmp.eq.s32.totalorder %s16, 1
      %p132 = scmp.ne.s32.totalorder %s127, %s129
      %p133 = scmp.eq.s32.totalorder %s16, 0
      %p134 = por %p132, %p133
      %p135 = scmp.ne.s32.totalorder %s127, %s129
      %p136 = scmp.eq.s32.totalorder %s21, 1
      %p137 = por %p135, %p136
      %p138 = scmp.ne.s32.totalorder %s129, %s130
      %p139 = scmp.eq.s32.totalorder %s21, 0
      %p140 = por %p138, %p139
      %p141 = scmp.ne.s32.totalorder %s129, %s130
      %p142 = scmp.eq.s32.totalorder %s22, 1
      %p143 = por %p141, %p142
      %p145 = scmp.ne.s32.totalorder %s130, %s144
      %p146 = scmp.eq.s32.totalorder %s22, 0
      %p147 = por %p145, %p146
      %s149 = sadd.s32 %s148, 1
      %p152 = scmp.eq.s32.totalorder %s16, 1
      %p153 = scmp.ne.s32.totalorder %s148, %s150
      %p154 = scmp.eq.s32.totalorder %s16, 0
      %p155 = por %p153, %p154
      %p156 = scmp.ne.s32.totalorder %s148, %s150
      %p157 = scmp.eq.s32.totalorder %s21, 1
      %p158 = por %p156, %p157
      %p159 = scmp.ne.s32.totalorder %s150, %s151
      %p160 = scmp.eq.s32.totalorder %s21, 0
      %p161 = por %p159, %p160
      %p162 = scmp.ne.s32.totalorder %s150, %s151
      %p163 = scmp.eq.s32.totalorder %s22, 1
      %p164 = por %p162, %p163
      %p166 = scmp.ne.s32.totalorder %s151, %s165
      %p167 = scmp.eq.s32.totalorder %s22, 0
      %p168 = por %p166, %p167
      %s170 = sadd.s32 %s169, 1
      %p173 = scmp.eq.s32.totalorder %s16, 1
      %p174 = scmp.ne.s32.totalorder %s169, %s171
      %p175 = scmp.eq.s32.totalorder %s16, 0
      %p176 = por %p174, %p175
      %p177 = scmp.ne.s32.totalorder %s169, %s171
      %p178 = scmp.eq.s32.totalorder %s21, 1
      %p179 = por %p177, %p178
      %p180 = scmp.ne.s32.totalorder %s171, %s172
      %p181 = scmp.eq.s32.totalorder %s21, 0
      %p182 = por %p180, %p181
      %p183 = scmp.ne.s32.totalorder %s171, %s172
      %p184 = scmp.eq.s32.totalorder %s22, 1
      %p185 = por %p183, %p184
      %p187 = scmp.ne.s32.totalorder %s172, %s186
      %p188 = scmp.eq.s32.totalorder %s22, 0
      %p189 = por %p187, %p188
      %s190 = ssub.s32 %s23, %s35
      %s191 = ssub.s32 %s24, %s31
      %s192 = sor.u32 %s190, %s191
      %p193 = scmp.eq.s32.totalorder %s192, 0
      %s195 = sadd.s32 %s194, 1
      %s196 = scalar_select %p193, %s194, %s195
      %p199 = pneg %p193
      %p200 = scmp.eq.s32.totalorder %s16, 1
      %p201 = por %p199, %p200
      %p202 = scmp.ne.s32.totalorder %s194, %s197
      %p203 = scmp.eq.s32.totalorder %s16, 0
      %p204 = por %p202, %p203
      %p205 = scmp.ne.s32.totalorder %s194, %s197
      %p206 = scmp.eq.s32.totalorder %s21, 1
      %p207 = por %p205, %p206
      %p208 = scmp.ne.s32.totalorder %s197, %s198
      %p209 = scmp.eq.s32.totalorder %s21, 0
      %p210 = por %p208, %p209
      %p211 = scmp.ne.s32.totalorder %s197, %s198
      %p212 = scmp.eq.s32.totalorder %s22, 1
      %p213 = por %p211, %p212
      %p215 = scmp.ne.s32.totalorder %s198, %s214
      %p216 = scmp.eq.s32.totalorder %s22, 0
      %p217 = por %p215, %p216
      %p218 = scmp.le.s32.totalorder 1, %s16
      %p219 = scmp.lt.s32.totalorder %s16, 3
      %p220 = pnand %p218, %p219
      %p221 = pneg %p220
      // Predicated region
      $region9: #{tpu_custom_call.1} parent=5 // pred_check
        _
      $region10: #{tpu_custom_call.1} parent=5 // pred_check_branch
        %223 = sbr.rel (%p220) target = $region12
      $region11: #{tpu_custom_call.1} parent=5 // pred_region
        %s224 = ssub.s32 %s16, 1
        // Predicated region
        $region13: #{tpu_custom_call.1} parent=11 // pred_check
          %p225 = pneg %p77
        $region14: #{tpu_custom_call.1} parent=11 // pred_check_branch
          %227 = sbr.rel (%p225) target = $region16
        $region15: #{tpu_custom_call.1} parent=11 // pred_region
          _
        $region16: #{tpu_custom_call.1} parent=11 // pred_fallthru
          _
        // Predicated region
        $region17: #{tpu_custom_call.1} parent=11 // pred_check
          %p228 = pneg %p98
        $region18: #{tpu_custom_call.1} parent=11 // pred_check_branch
          %230 = sbr.rel (%p228) target = $region20
        $region19: #{tpu_custom_call.1} parent=11 // pred_region
          _
        $region20: #{tpu_custom_call.1} parent=11 // pred_fallthru
          _
        // Predicated region
        $region21: #{tpu_custom_call.1} parent=11 // pred_check
          %p231 = pneg %p119
        $region22: #{tpu_custom_call.1} parent=11 // pred_check_branch
          %233 = sbr.rel (%p231) target = $region24
        $region23: #{tpu_custom_call.1} parent=11 // pred_region
          _
        $region24: #{tpu_custom_call.1} parent=11 // pred_fallthru
          _
        // Predicated region
        $region25: #{tpu_custom_call.1} parent=11 // pred_check
          %p234 = pneg %p140
        $region26: #{tpu_custom_call.1} parent=11 // pred_check_branch
          %236 = sbr.rel (%p234) target = $region28
        $region27: #{tpu_custom_call.1} parent=11 // pred_region
          _
        $region28: #{tpu_custom_call.1} parent=11 // pred_fallthru
          _
        // Predicated region
        $region29: #{tpu_custom_call.1} parent=11 // pred_check
          %p237 = pneg %p161
        $region30: #{tpu_custom_call.1} parent=11 // pred_check_branch
          %239 = sbr.rel (%p237) target = $region32
        $region31: #{tpu_custom_call.1} parent=11 // pred_region
          _
        $region32: #{tpu_custom_call.1} parent=11 // pred_fallthru
          _
        // Predicated region
        $region33: #{tpu_custom_call.1} parent=11 // pred_check
          %p240 = pneg %p182
        $region34: #{tpu_custom_call.1} parent=11 // pred_check_branch
          %242 = sbr.rel (%p240) target = $region36
        $region35: #{tpu_custom_call.1} parent=11 // pred_region
          _
        $region36: #{tpu_custom_call.1} parent=11 // pred_fallthru
          _
      $region12: #{tpu_custom_call.1} parent=5 // pred_fallthru
        _
      %p243 = scmp.lt.s32.totalorder %s16, 2
      // Predicated region
      $region37: #{tpu_custom_call.1} parent=5 // pred_check
        %p244 = pneg %p243
      $region38: #{tpu_custom_call.1} parent=5 // pred_check_branch
        %246 = sbr.rel (%p244) target = $region40
      $region39: #{tpu_custom_call.1} parent=5 // pred_region
        // Predicated region
        $region41: #{tpu_custom_call.1} parent=39 // pred_check
          %p247 = pneg %p50
        $region42: #{tpu_custom_call.1} parent=39 // pred_check_branch
          %249 = sbr.rel (%p247) target = $region44
        $region43: #{tpu_custom_call.1} parent=39 // pred_region
          %p250 = scmp.lt.s32.totalorder %s23, 1
          %s251 = scalar_select %p250, %s23, 1
          %p252 = scmp.lt.s32.totalorder %s24, 0
          %s253 = scalar_select %p252, %s24, 0
          %s254 = sadd.s32 %s253, %s251
          %s255 = smul.addr %s254, 4
          %s256 = scalar_lea.vmem %s0, %s255
        $region44: #{tpu_custom_call.1} parent=39 // pred_fallthru
          _
      $region40: #{tpu_custom_call.1} parent=5 // pred_fallthru
        _
      %p257 = scmp.le.s32.totalorder 1, %s16
      %p258 = scmp.lt.s32.totalorder %s16, 3
      %p259 = pnand %p257, %p258
      %p260 = pneg %p259
      // Predicated region
      $region45: #{tpu_custom_call.1} parent=5 // pred_check
        _
      $region46: #{tpu_custom_call.1} parent=5 // pred_check_branch
        %262 = sbr.rel (%p259) target = $region48
      $region47: #{tpu_custom_call.1} parent=5 // pred_region
        %s263 = ssub.s32 %s16, 1
        %p264 = scmp.lt.s32.totalorder %s25, 1
        %s265 = scalar_select %p264, %s25, 1
        %p266 = scmp.lt.s32.totalorder %s26, 0
        %s267 = scalar_select %p266, %s26, 0
        %s268 = sadd.s32 %s267, %s265
        %s269 = smul.addr %s268, 4
        %s270 = scalar_lea.vmem %s0, %s269
        %p271 = pneg %p56
        %p272 = pneg %p53
        %p273 = pneg %p77
        %p274 = pneg %p74
        %p275 = pneg %p98
        %p276 = pneg %p95
        %p277 = pneg %p119
        %p278 = pneg %p116
        %p279 = pneg %p140
        %p280 = pneg %p137
        %p281 = pneg %p161
        %p282 = pneg %p158
        %p283 = pneg %p182
        %p284 = pneg %p179
        %p285 = pneg %p210
        %p286 = pneg %p207
        %s287 = sand.u32 %s197, 1
        %s288 = scalar_lea.sflag [#allocation5], %s287
        %s289 = sand.u32 %s197, 1
        %s290 = smul.addr %s289, 8
        %s291 = scalar_lea.vmem [#allocation4], %s290
        %p292 = scmp.lt.s32.totalorder %s25, 1
        %s293 = scalar_select %p292, %s25, 1
        %p294 = scmp.lt.s32.totalorder %s26, 0
        %s295 = scalar_select %p294, %s26, 0
        %s296 = sadd.s32 %s295, %s293
        %s297 = smul.addr %s296, 4
        %s298 = scalar_lea.vmem %s0, %s297
        %p299 = scmp.eq.s32.totalorder %s26, 0
        // Predicated region
        $region49: #{tpu_custom_call.1} parent=47 // pred_check
          %p300 = pneg %p299
        $region50: #{tpu_custom_call.1} parent=47 // pred_check_branch
          %302 = sbr.rel (%p300) target = $region52
        $region51: #{tpu_custom_call.1} parent=47 // pred_region
          %vm303 = vcmask 27648
          %304 = vst.msk [vmem:[#allocation2] sm:$0xf] %vm303, 0.0
          %vm305 = vcmask 31744
          %306 = vst.msk [vmem:[#allocation3] sm:$0xff] %vm305, 0.0
        $region52: #{tpu_custom_call.1} parent=47 // pred_fallthru
          _
        %v307 = vld [vmem:[%s1] sm:$0xff]
        %v308 = vld [vmem:[%s2] sm:$0xff]
        %v309 = vld [vmem:[%s3] sm:$0xff]
        %v310 = vld [vmem:[%s4] sm:$0xff]
        %v311 = vld [vmem:[%s298] sm:$0xf]
        %v312 = vld [vmem:[#allocation2] sm:$0xf]
        %314 = vrot.lane.b32.xlu0 %v311, 4
        %v315 = vpop.permute.xlu0 %314
        %vm317 = vcmask 31744
        %v318 = vsel %vm317, %v312, %v315
        %320 = vrot.lane.b32.xlu0 %v312, 126
        %v321 = vpop.permute.xlu0 %320
        %323 = vrot.lane.b32.xlu0 %v311, 2
        %v324 = vpop.permute.xlu0 %323
        %vm326 = vcmask 15360
        %v327 = vsel %vm326, %v321, %v324
        %v329 = vrot.slane %v327, 4
        %vm331 = vcmask 1043456
        %v332 = vsel %vm331, %v318, %v329
        %333 = vrot.lane.b32.xlu0 %v311, 116
        %v334 = vpop.permute.xlu0 %333
        %vm336 = vcmask 27648
        %337 = vst.msk [vmem:[#allocation2] sm:$0xf] %vm336, %v334
        %339 = vset.pattern.permute.xlu0 0
        %340 = vperm.xlu0 %339, %v308
        %v341 = vpop.permute.xlu0 %340
        %vm343 = vcmask 97280
        %v345 = vsel %vm343, %v307, 0
        %v347 = vsel %vm331, %v311, 0
        %349 = vmatprep.subr.mxu0 0.0
        %350 = vmatpush1.msra.mxu0 %v332
        %351 = vmatprep.subr.mxu0 0.0
        %352 = vmatpush1.msra.mxu0 %v347
        %353 = vmatprep.subr.mxu0 0.0
        %354 = vmatpush1.msra.mxu0 0.0
        %355 = vmatprep.subr.mxu0 0.0
        %356 = vmatpush1.msra.mxu0 0.0
        %357 = vmatprep.subr.mxu0 0.0
        %358 = vmatpush1.msra.mxu0 0.0
        %359 = vmatprep.subr.mxu0 0.0
        %360 = vmatpush1.msra.mxu0 0.0
        %361 = vmatprep.subr.mxu0 0.0
        %362 = vmatpush1.msra.mxu0 0.0
        %363 = vmatprep.subr.mxu0 0.0
        %364 = vmatpush1.msra.mxu0 0.0
        %365 = vmatprep.subr.mxu0 0.0
        %366 = vmatpush1.msra.mxu0 0.0
        %367 = vmatprep.subr.mxu0 0.0
        %368 = vmatpush1.msra.mxu0 0.0
        %369 = vmatprep.subr.mxu0 0.0
        %370 = vmatpush1.msra.mxu0 0.0
        %371 = vmatprep.subr.mxu0 0.0
        %372 = vmatpush1.msra.mxu0 0.0
        %373 = vmatprep.subr.mxu0 0.0
        %374 = vmatpush1.msra.mxu0 0.0
        %375 = vmatprep.subr.mxu0 0.0
        %376 = vmatpush1.msra.mxu0 0.0
        %377 = vmatprep.subr.mxu0 0.0
        %378 = vmatpush1.msra.mxu0 0.0
        %379 = vmatprep.subr.mxu0 0.0
        %380 = vmatpush1.msra.mxu0 0.0
        %381 = vmatprep.subr.mxu0 0.0
        %382 = vmatpush1.msra.mxu0 0.0
        %383 = vmatprep.subr.mxu0 0.0
        %384 = vmatpush1.msra.mxu0 0.0
        %385 = vmatprep.subr.mxu0 0.0
        %386 = vmatpush1.msra.mxu0 0.0
        %387 = vmatprep.subr.mxu0 0.0
        %388 = vmatpush1.msra.mxu0 0.0
        %389 = vmatprep.subr.mxu0 0.0
        %390 = vmatpush1.msra.mxu0 0.0
        %391 = vmatprep.subr.mxu0 0.0
        %392 = vmatpush1.msra.mxu0 0.0
        %393 = vmatprep.subr.mxu0 0.0
        %394 = vmatpush1.msra.mxu0 0.0
        %395 = vmatprep.subr.mxu0 0.0
        %396 = vmatpush1.msra.mxu0 0.0
        %397 = vmatprep.subr.mxu0 0.0
        %398 = vmatpush1.msra.mxu0 0.0
        %399 = vmatprep.subr.mxu0 0.0
        %400 = vmatpush1.msra.mxu0 0.0
        %401 = vmatprep.subr.mxu0 0.0
        %402 = vmatpush1.msra.mxu0 0.0
        %403 = vmatprep.subr.mxu0 0.0
        %404 = vmatpush1.msra.mxu0 0.0
        %405 = vmatprep.subr.mxu0 0.0
        %406 = vmatpush1.msra.mxu0 0.0
        %407 = vmatprep.subr.mxu0 0.0
        %408 = vmatpush1.msra.mxu0 0.0
        %409 = vmatprep.subr.mxu0 0.0
        %410 = vmatpush1.msra.mxu0 0.0
        %411 = vmatprep.subr.mxu0 0.0
        %412 = vmatpush1.msra.mxu0 0.0
        %413 = vmatprep.mubr.f32.mxu0 0.0
        %414 = vmatmul.mubr.f32.gmra.mrb[0].mxu0 %v345
        %v415 = vpop.f32.mrb[0].mxu0
        %v416 = vadd.f32 %v341, %v415
        %v417 = vpop.f32.mrb[0].mxu0
        %418 = vdwg.mxu0
        %v419 = vmax.f32 %v416, 0.0
        %v420 = vld [vmem:[#allocation3] sm:$0xff]
        %422 = vrot.lane.b32.xlu0 %v419, 4
        %v423 = vpop.permute.xlu0 %422
        %v425 = vsel %vm317, %v420, %v423
        %427 = vrot.lane.b32.xlu0 %v420, 126
        %v428 = vpop.permute.xlu0 %427
        %430 = vrot.lane.b32.xlu0 %v419, 2
        %v431 = vpop.permute.xlu0 %430
        %v433 = vsel %vm326, %v428, %v431
        %434 = vrot.lane.b32.xlu0 %v419, 116
        %v435 = vpop.permute.xlu0 %434
        %437 = vst.msk [vmem:[#allocation3] sm:$0xff] %vm317, %v435
        %439 = vset.pattern.permute.xlu0 0
        %440 = vperm.xlu0 %439, %v310
        %v441 = vpop.permute.xlu0 %440
        %vm443 = vcmask 195584
        %v445 = vsel %vm443, %v309, 0
        %447 = vmatprep.subr.mxu0 0.0
        %448 = vmatpush1.msra.mxu0 %v425
        %449 = vmatprep.subr.mxu0 0.0
        %450 = vmatpush1.msra.mxu0 %v433
        %451 = vmatprep.subr.mxu0 0.0
        %452 = vmatpush1.msra.mxu0 %v419
        %453 = vmatprep.subr.mxu0 0.0
        %454 = vmatpush1.msra.mxu0 0.0
        %455 = vmatprep.subr.mxu0 0.0
        %456 = vmatpush1.msra.mxu0 0.0
        %457 = vmatprep.subr.mxu0 0.0
        %458 = vmatpush1.msra.mxu0 0.0
        %459 = vmatprep.subr.mxu0 0.0
        %460 = vmatpush1.msra.mxu0 0.0
        %461 = vmatprep.subr.mxu0 0.0
        %462 = vmatpush1.msra.mxu0 0.0
        %463 = vmatprep.subr.mxu0 0.0
        %464 = vmatpush1.msra.mxu0 0.0
        %465 = vmatprep.subr.mxu0 0.0
        %466 = vmatpush1.msra.mxu0 0.0
        %467 = vmatprep.subr.mxu0 0.0
        %468 = vmatpush1.msra.mxu0 0.0
        %469 = vmatprep.subr.mxu0 0.0
        %470 = vmatpush1.msra.mxu0 0.0
        %471 = vmatprep.subr.mxu0 0.0
        %472 = vmatpush1.msra.mxu0 0.0
        %473 = vmatprep.subr.mxu0 0.0
        %474 = vmatpush1.msra.mxu0 0.0
        %475 = vmatprep.subr.mxu0 0.0
        %476 = vmatpush1.msra.mxu0 0.0
        %477 = vmatprep.subr.mxu0 0.0
        %478 = vmatpush1.msra.mxu0 0.0
        %479 = vmatprep.subr.mxu0 0.0
        %480 = vmatpush1.msra.mxu0 0.0
        %481 = vmatprep.subr.mxu0 0.0
        %482 = vmatpush1.msra.mxu0 0.0
        %483 = vmatprep.subr.mxu0 0.0
        %484 = vmatpush1.msra.mxu0 0.0
        %485 = vmatprep.subr.mxu0 0.0
        %486 = vmatpush1.msra.mxu0 0.0
        %487 = vmatprep.subr.mxu0 0.0
        %488 = vmatpush1.msra.mxu0 0.0
        %489 = vmatprep.subr.mxu0 0.0
        %490 = vmatpush1.msra.mxu0 0.0
        %491 = vmatprep.subr.mxu0 0.0
        %492 = vmatpush1.msra.mxu0 0.0
        %493 = vmatprep.subr.mxu0 0.0
        %494 = vmatpush1.msra.mxu0 0.0
        %495 = vmatprep.subr.mxu0 0.0
        %496 = vmatpush1.msra.mxu0 0.0
        %497 = vmatprep.subr.mxu0 0.0
        %498 = vmatpush1.msra.mxu0 0.0
        %499 = vmatprep.subr.mxu0 0.0
        %500 = vmatpush1.msra.mxu0 0.0
        %501 = vmatprep.subr.mxu0 0.0
        %502 = vmatpush1.msra.mxu0 0.0
        %503 = vmatprep.subr.mxu0 0.0
        %504 = vmatpush1.msra.mxu0 0.0
        %505 = vmatprep.subr.mxu0 0.0
        %506 = vmatpush1.msra.mxu0 0.0
        %507 = vmatprep.subr.mxu0 0.0
        %508 = vmatpush1.msra.mxu0 0.0
        %509 = vmatprep.subr.mxu0 0.0
        %510 = vmatpush1.msra.mxu0 0.0
        %511 = vmatprep.mubr.f32.mxu0 0.0
        %512 = vmatmul.mubr.f32.gmra.mrb[0].mxu0 %v445
        %v513 = vpop.f32.mrb[0].mxu0
        %v514 = vadd.f32 %v441, %v513
        %v515 = vpop.f32.mrb[0].mxu0
        %516 = vdwg.mxu0
        %v517 = vmax.f32 %v514, 0.0
        %v518 = vld [vmem:[%s298] sm:$0xf]
        %v519 = vld [vmem:[%s5] sm:$0xff]
        %v520 = vld [vmem:[%s6] sm:$0xff]
        %522 = vset.pattern.permute.xlu0 0
        %523 = vperm.xlu0 %522, %v520
        %v524 = vpop.permute.xlu0 %523
        %v527 = vsel %vm317, %v519, 0
        %v530 = vsel %vm331, %v518, 0
        %532 = vmatprep.subr.mxu0 0.0
        %533 = vmatpush1.msra.mxu0 %v530
        %534 = vmatprep.subr.mxu0 0.0
        %535 = vmatpush1.msra.mxu0 0.0
        %536 = vmatprep.subr.mxu0 0.0
        %537 = vmatpush1.msra.mxu0 0.0
        %538 = vmatprep.subr.mxu0 0.0
        %539 = vmatpush1.msra.mxu0 0.0
        %540 = vmatprep.subr.mxu0 0.0
        %541 = vmatpush1.msra.mxu0 0.0
        %542 = vmatprep.subr.mxu0 0.0
        %543 = vmatpush1.msra.mxu0 0.0
        %544 = vmatprep.subr.mxu0 0.0
        %545 = vmatpush1.msra.mxu0 0.0
        %546 = vmatprep.subr.mxu0 0.0
        %547 = vmatpush1.msra.mxu0 0.0
        %548 = vmatprep.subr.mxu0 0.0
        %549 = vmatpush1.msra.mxu0 0.0
        %550 = vmatprep.subr.mxu0 0.0
        %551 = vmatpush1.msra.mxu0 0.0
        %552 = vmatprep.subr.mxu0 0.0
        %553 = vmatpush1.msra.mxu0 0.0
        %554 = vmatprep.subr.mxu0 0.0
        %555 = vmatpush1.msra.mxu0 0.0
        %556 = vmatprep.subr.mxu0 0.0
        %557 = vmatpush1.msra.mxu0 0.0
        %558 = vmatprep.subr.mxu0 0.0
        %559 = vmatpush1.msra.mxu0 0.0
        %560 = vmatprep.subr.mxu0 0.0
        %561 = vmatpush1.msra.mxu0 0.0
        %562 = vmatprep.subr.mxu0 0.0
        %563 = vmatpush1.msra.mxu0 0.0
        %564 = vmatprep.subr.mxu0 0.0
        %565 = vmatpush1.msra.mxu0 0.0
        %566 = vmatprep.subr.mxu0 0.0
        %567 = vmatpush1.msra.mxu0 0.0
        %568 = vmatprep.subr.mxu0 0.0
        %569 = vmatpush1.msra.mxu0 0.0
        %570 = vmatprep.subr.mxu0 0.0
        %571 = vmatpush1.msra.mxu0 0.0
        %572 = vmatprep.subr.mxu0 0.0
        %573 = vmatpush1.msra.mxu0 0.0
        %574 = vmatprep.subr.mxu0 0.0
        %575 = vmatpush1.msra.mxu0 0.0
        %576 = vmatprep.subr.mxu0 0.0
        %577 = vmatpush1.msra.mxu0 0.0
        %578 = vmatprep.subr.mxu0 0.0
        %579 = vmatpush1.msra.mxu0 0.0
        %580 = vmatprep.subr.mxu0 0.0
        %581 = vmatpush1.msra.mxu0 0.0
        %582 = vmatprep.subr.mxu0 0.0
        %583 = vmatpush1.msra.mxu0 0.0
        %584 = vmatprep.subr.mxu0 0.0
        %585 = vmatpush1.msra.mxu0 0.0
        %586 = vmatprep.subr.mxu0 0.0
        %587 = vmatpush1.msra.mxu0 0.0
        %588 = vmatprep.subr.mxu0 0.0
        %589 = vmatpush1.msra.mxu0 0.0
        %590 = vmatprep.subr.mxu0 0.0
        %591 = vmatpush1.msra.mxu0 0.0
        %592 = vmatprep.subr.mxu0 0.0
        %593 = vmatpush1.msra.mxu0 0.0
        %594 = vmatprep.subr.mxu0 0.0
        %595 = vmatpush1.msra.mxu0 0.0
        %596 = vmatprep.mubr.f32.mxu0 0.0
        %597 = vmatmul.mubr.f32.gmra.mrb[0].mxu0 %v527
        %v598 = vpop.f32.mrb[0].mxu0
        %v599 = vadd.f32 %v524, %v598
        %v600 = vpop.f32.mrb[0].mxu0
        %601 = vdwg.mxu0
        %v602 = vadd.f32 %v517, %v599
        %v603 = vmax.f32 %v602, 0.0
        %vm604 = vcmask 130048
        %605 = vst.msk [vmem:[%s291] sm:$0xff] %vm604, %v603
        %s606 = sand.u32 %s197, 1
        %s607 = scalar_lea.sflag [#allocation5], %s606
        %s608 = sand.u32 %s197, 1
        %s609 = smul.addr %s608, 8
        %s610 = scalar_lea.vmem [#allocation4], %s609
        // Predicated region
        $region53: #{tpu_custom_call.1} parent=47 // pred_check
          %p611 = pneg %p207
        $region54: #{tpu_custom_call.1} parent=47 // pred_check_branch
          %613 = sbr.rel (%p611) target = $region56
        $region55: #{tpu_custom_call.1} parent=47 // pred_region
          %s615 = ssub.s32 128, 128
          %616 = vsyncadd %s607, %s615
          %s617 = sadd.s32 %s26, %s25
          %s618 = smul.addr %s617, 128
          %s619 = scalar_lea.hbm %s7, %s618
          %s621 = sshll.u32 %s610, 4
          %s622 = int_to_ptr.vmem [resolvable:$true] %s621
          %624 = dma.vmem_to_hbm [thread:$0]  %s622, 128, %s619, %s607
        $region56: #{tpu_custom_call.1} parent=47 // pred_fallthru
          _
      $region48: #{tpu_custom_call.1} parent=5 // pred_fallthru
        _
      %p625 = scmp.le.s32.totalorder 2, %s16
      // Predicated region
      $region57: #{tpu_custom_call.1} parent=5 // pred_check
        %p626 = pneg %p625
      $region58: #{tpu_custom_call.1} parent=5 // pred_check_branch
        %628 = sbr.rel (%p626) target = $region60
      $region59: #{tpu_custom_call.1} parent=5 // pred_region
        %s629 = ssub.s32 %s16, 2
        // Predicated region
        $region61: #{tpu_custom_call.1} parent=59 // pred_check
          %p630 = pneg %p213
        $region62: #{tpu_custom_call.1} parent=59 // pred_check_branch
          %632 = sbr.rel (%p630) target = $region64
        $region63: #{tpu_custom_call.1} parent=59 // pred_region
          %s633 = sand.u32 %s198, 1
          %s634 = scalar_lea.sflag [#allocation5], %s633
          %s635 = sand.u32 %s198, 1
          %s636 = smul.addr %s635, 8
          %s637 = scalar_lea.vmem [#allocation4], %s636
          %638 = dma.done %s634, 128
        $region64: #{tpu_custom_call.1} parent=59 // pred_fallthru
          _
      $region60: #{tpu_custom_call.1} parent=5 // pred_fallthru
        _
    $region6: #{tpu_custom_call.1} parent=1 // loop_footer
      %s20 = sadd.s32 1, %s16
    $region7: #{tpu_custom_call.1} parent=1 // loop_footer_branch
      %15 = sbr.rel target = $region3
    $region8: #{tpu_custom_call.1} parent=1 // loop_exit
      _
    %639 = vsyncpa [#allocation5], 1
    %s640 = scalar_lea.sflag [#allocation5], 1
    %641 = vsyncpa %s640, 1

</llo_original>
